<compile_context>
chip_gen: v7x
topology: tpu7x:2x2x1
jax: 0.10.0
libtpu: 0.0.40
codegen_flags: <defaults>
</compile_context>

<pallas_src>
import jax
import jax.numpy as jnp
from jax.experimental import pallas as pl
from jax.experimental.pallas import tpu as pltpu

LN_EPS = 1e-5        # nn.LayerNorm default
NORM_EPS = 1e-12     # F.normalize default


def _triple_head_kernel(x_ref, w_ref, b_ref, o_ref):
    """Fused LayerNorm (affine pre-folded) + projection + L2-normalize.

    x_ref: [TB, F]  backbone features tile (f32 or bf16)
    w_ref: [F,  V]  gamma-folded projection weight (same dtype as x)
    b_ref: [1,  V]  beta-folded bias row (f32)
    o_ref: [TB, V]  L2-normalized embeddings
    """
    # LayerNorm statistics in f32 regardless of the storage dtype.
    xf = x_ref[...].astype(jnp.float32)
    mean = jnp.mean(xf, axis=-1, keepdims=True)
    centered = xf - mean
    var = jnp.mean(centered * centered, axis=-1, keepdims=True)
    xn = centered * jax.lax.rsqrt(var + LN_EPS)

    # Feed the MXU in the weight's dtype (bf16-native on v5e/v6e/v7x),
    # accumulate in f32.
    xn = xn.astype(w_ref.dtype)
    y = jnp.dot(xn, w_ref[...], preferred_element_type=jnp.float32)
    y = y + b_ref[...]

    # L2 normalize (F.normalize semantics: divide by max(norm, eps)).
    sumsq = jnp.sum(y * y, axis=-1, keepdims=True)
    inv = jax.lax.rsqrt(jnp.maximum(sumsq, NORM_EPS * NORM_EPS))
    o_ref[...] = (y * inv).astype(o_ref.dtype)


def triple_head(features, gamma, beta, w_t, *, block_b=512, out_dtype=None):
    """features: [B, F]; gamma/beta: [F] (f32); w_t: [F, V] (transposed dense weight).

    Returns [B, V] L2-normalized embeddings in `out_dtype` (default: features.dtype).
    """
    B, F = features.shape
    V = w_t.shape[1]
    if out_dtype is None:
        out_dtype = features.dtype

    # Fold the LayerNorm affine into the projection (in f32), then cast the
    # weight to the feature dtype for the MXU feed.
    w32 = w_t.astype(jnp.float32)
    w_fold = (gamma.astype(jnp.float32)[:, None] * w32).astype(features.dtype)
    b_fold = (beta.astype(jnp.float32)[None, :] @ w32).astype(jnp.float32)  # [1, V]

    # Batch tiling: resident W/bias, pipelined x/out tiles.
    block_b = max(8, -(-int(block_b) // 8) * 8)   # keep tile sublane-aligned
    if B <= block_b:
        tb, bp = B, B                              # single full-dim block is legal
        x_in = features
    else:
        tb = block_b
        bp = pl.cdiv(B, tb) * tb
        x_in = features if bp == B else jnp.pad(features, ((0, bp - B), (0, 0)))

    # VMEM budget: double-buffered x/out tiles + resident weight/bias (+ slack).
    x_it = jnp.dtype(features.dtype).itemsize
    w_it = jnp.dtype(w_fold.dtype).itemsize
    o_it = jnp.dtype(out_dtype).itemsize
    est = 2 * tb * F * x_it + F * V * w_it + 2 * V * 4 + 2 * tb * V * o_it
    vmem_limit = int(min(max(4 * est, 32 * 1024 * 1024), 64 * 1024 * 1024))

    out = pl.pallas_call(
        _triple_head_kernel,
        out_shape=jax.ShapeDtypeStruct((bp, V), out_dtype),
        grid=(bp // tb,),
        in_specs=[
            pl.BlockSpec((tb, F), lambda i: (i, 0)),   # x tiles (pipelined)
            pl.BlockSpec((F, V), lambda i: (0, 0)),    # resident weight
            pl.BlockSpec((1, V), lambda i: (0, 0)),    # resident bias
        ],
        out_specs=pl.BlockSpec((tb, V), lambda i: (i, 0)),
        compiler_params=pltpu.CompilerParams(
            dimension_semantics=("parallel",),
            vmem_limit_bytes=vmem_limit),
    )(x_in, w_fold, b_fold)

    return out[:B] if bp != B else out


def triple_forward(x_nchw, gamma, beta, w_t, *, block_b=512, out_dtype=None):
    """Full Triple.forward. x_nchw: [B, C, H, W] with C == num_features.

    TODO(synk): backbone stand-in only — global average pool over (H, W) +
    flatten, mimicking ResNet's final avgpool + flatten.
    """
    features = jnp.mean(x_nchw.astype(jnp.float32), axis=(2, 3)).astype(x_nchw.dtype)
    return triple_head(features, gamma, beta, w_t, block_b=block_b, out_dtype=out_dtype)


def _reference(x_nchw, gamma, beta, w_t):
    """Pure-f32 JAX reference matching the PyTorch semantics."""
    f = jnp.mean(x_nchw.astype(jnp.float32), axis=(2, 3))
    mean = jnp.mean(f, axis=-1, keepdims=True)
    var = jnp.mean((f - mean) ** 2, axis=-1, keepdims=True)
    xn = (f - mean) / jnp.sqrt(var + LN_EPS) * gamma + beta
    y = xn @ w_t.astype(jnp.float32)
    n = jnp.maximum(jnp.linalg.norm(y, axis=-1, keepdims=True), NORM_EPS)
    return y / n


if __name__ == "__main__":
    # Small, TPU-friendly synthetic shapes (real ResNet-101 would have F=2048).
    B, C, H, W = 2, 256, 8, 8
    VECDIM = 128

    key = jax.random.PRNGKey(0)
    kx, kw, kg, kb = jax.random.split(key, 4)

    x = jax.random.normal(kx, (B, C, H, W), dtype=jnp.float32)
    gamma = 1.0 + 0.1 * jax.random.normal(kg, (C,), dtype=jnp.float32)
    beta = 0.1 * jax.random.normal(kb, (C,), dtype=jnp.float32)
    w = jax.random.normal(kw, (VECDIM, C), dtype=jnp.float32) / jnp.sqrt(C)
    w_t = w.T                                          # [C, VECDIM]

    ref = jax.block_until_ready(_reference(x, gamma, beta, w_t))

    # ---- f32 path: tight check against the PyTorch-equivalent reference. ----
    out_f32 = jax.block_until_ready(triple_forward(x, gamma, beta, w_t))
    assert out_f32.shape == (B, VECDIM)
    assert jnp.allclose(out_f32, ref, atol=1e-4, rtol=1e-4), "f32 mismatch vs reference"
    assert jnp.allclose(jnp.linalg.norm(out_f32, axis=-1), 1.0, atol=1e-4)

    # ---- bf16 path (bandwidth-optimized storage): relaxed check. ----
    out_bf16 = jax.block_until_ready(
        triple_forward(x.astype(jnp.bfloat16), gamma, beta, w_t))
    assert out_bf16.dtype == jnp.bfloat16
    out_bf16_f32 = out_bf16.astype(jnp.float32)
    assert jnp.allclose(out_bf16_f32, ref, atol=3e-2, rtol=3e-2), "bf16 mismatch"
    assert jnp.allclose(jnp.linalg.norm(out_bf16_f32, axis=-1), 1.0, atol=1e-2)

    # ---- Multi-tile + ragged-batch path (B not a multiple of the tile). ----
    B2 = 20
    x2 = jax.random.normal(kx, (B2, C, H, W), dtype=jnp.float32)
    f2 = jnp.mean(x2, axis=(2, 3))
    out_tiled = jax.block_until_ready(triple_head(f2, gamma, beta, w_t, block_b=8))
    ref2 = jax.block_until_ready(_reference(x2, gamma, beta, w_t))
    assert out_tiled.shape == (B2, VECDIM)
    assert jnp.allclose(out_tiled, ref2, atol=1e-4, rtol=1e-4), "tiled mismatch"

    print("KERNEL_OK")
</pallas_src>

<mosaic_0001>
module attributes {stable_mosaic.version = 11 : i64} {
  func.func @_triple_head_kernel(%arg0: i32, %arg1: memref<2x256xf32, #tpu.memory_space<vmem>>, %arg2: memref<256x128xf32, #tpu.memory_space<vmem>>, %arg3: memref<1x128xf32, #tpu.memory_space<vmem>>, %arg4: memref<2x128xf32, #tpu.memory_space<vmem>>) attributes {dimension_semantics = [#tpu.dimension_semantics<parallel>], iteration_bounds = array<i64: 1>, scalar_prefetch = 0 : i64, scratch_operands = 0 : i64, tpu.core_type = #tpu.core_type<tc>, window_params = [{transform_indices = @transform_0, window_bounds = array<i64: 2, 256>}, {pipeline_mode = #tpu.pipeline_mode<synchronous>, transform_indices = @transform_1, window_bounds = array<i64: 256, 128>}, {pipeline_mode = #tpu.pipeline_mode<synchronous>, transform_indices = @transform_2, window_bounds = array<i64: 1, 128>}, {transform_indices = @transform_3, window_bounds = array<i64: 2, 128>}]} {
    %c0 = arith.constant 0 : index
    %c0_0 = arith.constant 0 : index
    %0 = vector.load %arg1[%c0, %c0_0] : memref<2x256xf32, #tpu.memory_space<vmem>>, vector<2x256xf32>
    %cst = arith.constant dense<0.000000e+00> : vector<2xf32>
    %1 = vector.multi_reduction <add>, %0, %cst [1] : vector<2x256xf32> to vector<2xf32>
    %2 = vector.shape_cast %1 : vector<2xf32> to vector<2x1xf32>
    %cst_1 = arith.constant 2.560000e+02 : f32
    %3 = vector.broadcast %cst_1 : f32 to vector<2x1xf32>
    %4 = arith.divf %2, %3 : vector<2x1xf32>
    %5 = vector.broadcast %4 : vector<2x1xf32> to vector<2x256xf32>
    %6 = arith.subf %0, %5 : vector<2x256xf32>
    %7 = arith.mulf %6, %6 : vector<2x256xf32>
    %cst_2 = arith.constant dense<0.000000e+00> : vector<2xf32>
    %8 = vector.multi_reduction <add>, %7, %cst_2 [1] : vector<2x256xf32> to vector<2xf32>
    %9 = vector.shape_cast %8 : vector<2xf32> to vector<2x1xf32>
    %cst_3 = arith.constant 2.560000e+02 : f32
    %10 = vector.broadcast %cst_3 : f32 to vector<2x1xf32>
    %11 = arith.divf %9, %10 : vector<2x1xf32>
    %cst_4 = arith.constant 9.99999974E-6 : f32
    %12 = vector.broadcast %cst_4 : f32 to vector<2x1xf32>
    %13 = arith.addf %11, %12 : vector<2x1xf32>
    %14 = math.rsqrt %13 : vector<2x1xf32>
    %15 = vector.broadcast %14 : vector<2x1xf32> to vector<2x256xf32>
    %16 = arith.mulf %6, %15 : vector<2x256xf32>
    %c0_5 = arith.constant 0 : index
    %c0_6 = arith.constant 0 : index
    %17 = vector.load %arg2[%c0_5, %c0_6] : memref<256x128xf32, #tpu.memory_space<vmem>>, vector<256x128xf32>
    %cst_7 = arith.constant dense<0.000000e+00> : vector<2x128xf32>
    %18 = tpu.matmul %16, %17, %cst_7 {dimension_numbers = #tpu.dot_dimension_numbers<[1], [0], [0], [1], [0, 0, 1, 1], [], []>} : vector<2x256xf32>, vector<256x128xf32>, vector<2x128xf32> -> vector<2x128xf32>
    %c0_8 = arith.constant 0 : index
    %c0_9 = arith.constant 0 : index
    %19 = vector.load %arg3[%c0_8, %c0_9] : memref<1x128xf32, #tpu.memory_space<vmem>>, vector<1x128xf32>
    %20 = vector.broadcast %19 : vector<1x128xf32> to vector<2x128xf32>
    %21 = arith.addf %18, %20 : vector<2x128xf32>
    %22 = arith.mulf %21, %21 : vector<2x128xf32>
    %cst_10 = arith.constant dense<0.000000e+00> : vector<2xf32>
    %23 = vector.multi_reduction <add>, %22, %cst_10 [1] : vector<2x128xf32> to vector<2xf32>
    %24 = vector.shape_cast %23 : vector<2xf32> to vector<2x1xf32>
    %cst_11 = arith.constant 1.000000e-24 : f32
    %25 = vector.broadcast %cst_11 : f32 to vector<2x1xf32>
    %26 = arith.maximumf %24, %25 : vector<2x1xf32>
    %27 = math.rsqrt %26 : vector<2x1xf32>
    %28 = vector.broadcast %27 : vector<2x1xf32> to vector<2x128xf32>
    %29 = arith.mulf %21, %28 : vector<2x128xf32>
    %c0_12 = arith.constant 0 : index
    %c0_13 = arith.constant 0 : index
    %30 = vector.load %arg4[%c0_12, %c0_13] : memref<2x128xf32, #tpu.memory_space<vmem>>, vector<2x128xf32>
    tpu.vector_store %arg4[%c0_12, %c0_13], %29 {strides = array<i32>} : memref<2x128xf32, #tpu.memory_space<vmem>>, vector<2x128xf32>,
    return
  }
  func.func @transform_0(%arg0: i32) -> (i32, i32) {
    %c0_i32 = arith.constant 0 : i32
    %c0_i32_0 = arith.constant 0 : i32
    return %arg0, %c0_i32 : i32, i32
  }
  func.func @transform_1(%arg0: i32) -> (i32, i32) {
    %c0_i32 = arith.constant 0 : i32
    %c0_i32_0 = arith.constant 0 : i32
    %c0_i32_1 = arith.constant 0 : i32
    return %c0_i32, %c0_i32_0 : i32, i32
  }
  func.func @transform_2(%arg0: i32) -> (i32, i32) {
    %c0_i32 = arith.constant 0 : i32
    %c0_i32_0 = arith.constant 0 : i32
    %c0_i32_1 = arith.constant 0 : i32
    return %c0_i32, %c0_i32_0 : i32, i32
  }
  func.func @transform_3(%arg0: i32) -> (i32, i32) {
    %c0_i32 = arith.constant 0 : i32
    %c0_i32_0 = arith.constant 0 : i32
    return %arg0, %c0_i32 : i32, i32
  }
}

</mosaic_0001>

<llo_original>
// kernel: tpu_custom_call.1
$region0: #{tpu_custom_call.1}
  #allocation0 [shape = 'u32[]', space=smem, size = 0x4, offset = 0x4, fixed_abs, tag = 'smem constant byte address 0x4 - core index']
  #allocation1 [shape = 'u32[144,128]{1,0:T(1,128)}', space=vmem, size = 0x12000, scoped, tag = 'internal scratch']
  %s0 = inlined_call_operand.hbm [shape: f32[2,256], index: 0, kind: input, shape index: {}]
  %s1 = inlined_call_operand.hbm [shape: f32[256,128], index: 1, kind: input, shape index: {}]
  %s2 = inlined_call_operand.vmem [shape: f32[1,128], index: 2, kind: input, shape index: {}]
  %s3 = inlined_call_operand.hbm [shape: f32[2,128], index: 3, kind: output, shape index: {}]
  %s4 = sld [smem:[#allocation0]]
  $region30: #{tpu_custom_call.1} parent=0
    _
  %s6 = ssub.s32 1, %s4
  %s7 = scalar_select 0, %s6, %s4
  $region1: #{tpu_custom_call.1} parent=0
    #allocation2 [shape = 'u8[2048]{0}', space=vmem, size = 0x800, scoped, tag = 'input window, operand 0, single buffered']
    #allocation3 [shape = 's32[1]{0}', space=sflag, size = 0x4, scoped, tag = 'scoped memory for tpu_custom_call.1']
    #allocation4 [shape = 's32[1]{0}', space=sflag, size = 0x4, scoped, tag = 'scoped memory for tpu_custom_call.1']
    #allocation5 [shape = 'u8[131072]{0}', space=vmem, size = 0x20000, scoped, tag = 'input window, operand 1, single buffered']
    #allocation6 [shape = 's32[1]{0}', space=sflag, size = 0x4, scoped, tag = 'scoped memory for tpu_custom_call.1']
    #allocation7 [shape = 'u8[1024]{0}', space=vmem, size = 0x400, scoped, tag = 'output window, operand 0, single buffered']
    %8 = vsyncpa [#allocation3], 0
    %9 = vsyncpa [#allocation6], 0
    %10 = vsyncpa [#allocation4], 0
    // Predicated region
    $region2: #{tpu_custom_call.1} parent=1 // pred_check
      _
    $region3: #{tpu_custom_call.1} parent=1 // pred_check_branch
      %12 = sbr.rel (0) target = $region5
    $region4: #{tpu_custom_call.1} parent=1 // pred_region
      %s14 = ssub.s32 64, 64
      %15 = vsyncadd [#allocation3], %s14
      %s17 = sshll.u32 [#allocation2], 4
      %s18 = int_to_ptr.vmem [resolvable:$true] %s17
      %20 = dma.hbm_to_vmem [thread:$0]  %s0, 64, %s18, [#allocation3]
    $region5: #{tpu_custom_call.1} parent=1 // pred_fallthru
      _
    // Predicated region
    $region6: #{tpu_custom_call.1} parent=1 // pred_check
      _
    $region7: #{tpu_custom_call.1} parent=1 // pred_check_branch
      %22 = sbr.rel (0) target = $region9
    $region8: #{tpu_custom_call.1} parent=1 // pred_region
      %s24 = ssub.s32 4096, 4096
      %25 = vsyncadd [#allocation6], %s24
      %s26 = sshll.u32 [#allocation5], 4
      %s27 = int_to_ptr.vmem [resolvable:$true] %s26
      %32 = dma.hbm_to_vmem [thread:$0]  %s1, 4096, %s27, [#allocation6], 128, 128, 8
    $region9: #{tpu_custom_call.1} parent=1 // pred_fallthru
      _
    // Predicated region
    $region10: #{tpu_custom_call.1} parent=1 // pred_check
      _
    $region11: #{tpu_custom_call.1} parent=1 // pred_check_branch
      %34 = sbr.rel (0) target = $region13
    $region12: #{tpu_custom_call.1} parent=1 // pred_region
      _
    $region13: #{tpu_custom_call.1} parent=1 // pred_fallthru
      _
    // Predicated region
    $region14: #{tpu_custom_call.1} parent=1 // pred_check
      _
    $region15: #{tpu_custom_call.1} parent=1 // pred_check_branch
      %36 = sbr.rel (0) target = $region17
    $region16: #{tpu_custom_call.1} parent=1 // pred_region
      %37 = dma.done [#allocation3], 64
    $region17: #{tpu_custom_call.1} parent=1 // pred_fallthru
      _
    // Predicated region
    $region18: #{tpu_custom_call.1} parent=1 // pred_check
      _
    $region19: #{tpu_custom_call.1} parent=1 // pred_check_branch
      %39 = sbr.rel (0) target = $region21
    $region20: #{tpu_custom_call.1} parent=1 // pred_region
      %40 = dma.done [#allocation6], 4096
    $region21: #{tpu_custom_call.1} parent=1 // pred_fallthru
      _
    %v41 = vld [vmem:[#allocation2] sm:$0xf]
    %v44 = vunpack.c.l.s4 1983009808
    %v45 = vunpack.c.0.s8 %v44
    %v46 = vlaneseq
    %v47 = vshrl.u32 %v46, 7
    %v48 = vsub.s32 %v45, %v47
    %v49 = vrot.slane %v41, %v48
    %v50 = vcombine.high %v49, %v49
    %vm53 = vcmask 1041408
    %v54 = vsel %vm53, %v49, 0.0
    %v55 = vsel %vm53, %v50, 0.0
    %v56 = vadd.f32 %v54, %v55
    %57 = vadd.xlane.f32.xlu0 %v56
    %v58 = vpop.xlane.xlu0 %57
    %v59 = vrcp.pop 256.0
    %v60 = vmul.f32 %v58, %v59
    %v63 = vunpack.c.l.s4 269488144
    %v64 = vunpack.c.0.s8 %v63
    %v65 = vlaneseq
    %v66 = vshrl.u32 %v65, 7
    %v67 = vsub.s32 %v64, %v66
    %v68 = vrot.slane %v60, %v67
    %v70 = vsub.f32 %v41, %v68
    %v71 = vmul.f32 %v70, %v70
    %v74 = vunpack.c.l.s4 1983009808
    %v75 = vunpack.c.0.s8 %v74
    %v76 = vlaneseq
    %v77 = vshrl.u32 %v76, 7
    %v78 = vsub.s32 %v75, %v77
    %v79 = vrot.slane %v71, %v78
    %v80 = vcombine.high %v79, %v79
    %v83 = vsel %vm53, %v79, 0.0
    %v84 = vsel %vm53, %v80, 0.0
    %v85 = vadd.f32 %v83, %v84
    %86 = vadd.xlane.f32.xlu0 %v85
    %v87 = vpop.xlane.xlu0 %86
    %v88 = vmul.f32 %v87, %v59
    %v89 = vadd.f32 %v88, 1e-05
    %v90 = vrsqrt.pop %v89
    %v93 = vunpack.c.l.s4 269488144
    %v94 = vunpack.c.0.s8 %v93
    %v95 = vlaneseq
    %v96 = vshrl.u32 %v95, 7
    %v97 = vsub.s32 %v94, %v96
    %v98 = vrot.slane %v90, %v97
    %v100 = vmul.f32 %v70, %v98
    %v101 = vld [vmem:[#allocation5] sm:$0xff]
    %v102 = vld [vmem:[#allocation5 + $0x8] sm:$0xff]
    %v103 = vld [vmem:[#allocation5 + $0x10] sm:$0xff]
    %v104 = vld [vmem:[#allocation5 + $0x18] sm:$0xff]
    %v105 = vld [vmem:[#allocation5 + $0x20] sm:$0xff]
    %v106 = vld [vmem:[#allocation5 + $0x28] sm:$0xff]
    %v107 = vld [vmem:[#allocation5 + $0x30] sm:$0xff]
    %v108 = vld [vmem:[#allocation5 + $0x38] sm:$0xff]
    %v109 = vld [vmem:[#allocation5 + $0x40] sm:$0xff]
    %v110 = vld [vmem:[#allocation5 + $0x48] sm:$0xff]
    %v111 = vld [vmem:[#allocation5 + $0x50] sm:$0xff]
    %v112 = vld [vmem:[#allocation5 + $0x58] sm:$0xff]
    %v113 = vld [vmem:[#allocation5 + $0x60] sm:$0xff]
    %v114 = vld [vmem:[#allocation5 + $0x68] sm:$0xff]
    %v115 = vld [vmem:[#allocation5 + $0x70] sm:$0xff]
    %v116 = vld [vmem:[#allocation5 + $0x78] sm:$0xff]
    %v117 = vld [vmem:[#allocation5 + $0x80] sm:$0xff]
    %v118 = vld [vmem:[#allocation5 + $0x88] sm:$0xff]
    %v119 = vld [vmem:[#allocation5 + $0x90] sm:$0xff]
    %v120 = vld [vmem:[#allocation5 + $0x98] sm:$0xff]
    %v121 = vld [vmem:[#allocation5 + $0xa0] sm:$0xff]
    %v122 = vld [vmem:[#allocation5 + $0xa8] sm:$0xff]
    %v123 = vld [vmem:[#allocation5 + $0xb0] sm:$0xff]
    %v124 = vld [vmem:[#allocation5 + $0xb8] sm:$0xff]
    %v125 = vld [vmem:[#allocation5 + $0xc0] sm:$0xff]
    %v126 = vld [vmem:[#allocation5 + $0xc8] sm:$0xff]
    %v127 = vld [vmem:[#allocation5 + $0xd0] sm:$0xff]
    %v128 = vld [vmem:[#allocation5 + $0xd8] sm:$0xff]
    %v129 = vld [vmem:[#allocation5 + $0xe0] sm:$0xff]
    %v130 = vld [vmem:[#allocation5 + $0xe8] sm:$0xff]
    %v131 = vld [vmem:[#allocation5 + $0xf0] sm:$0xff]
    %v132 = vld [vmem:[#allocation5 + $0xf8] sm:$0xff]
    %v133 = vld [vmem:[%s2] sm:$0x1]
    %v135 = vlaneseq
    %v136 = vshrl.u32 %v135, 7
    %v137 = vsub.s32 0, %v136
    %v138 = vrot.slane %v133, %v137
    %v142 = vunpack.c.l.s4 1983009808
    %v143 = vunpack.c.0.s8 %v142
    %v144 = vlaneseq
    %v145 = vshrl.u32 %v144, 7
    %v146 = vsub.s32 %v143, %v145
    %v147 = vrot.slane %v100, %v146
    %v148 = vcombine.high %v147, %v147
    %151 = vmatprep.subr.mxu0 0.0
    %152 = vmatpush1.msra.mxu0 %v101
    %153 = vmatprep.subr.mxu0 0.0
    %154 = vmatpush1.msra.mxu0 %v102
    %155 = vmatprep.subr.mxu0 0.0
    %156 = vmatpush1.msra.mxu0 %v103
    %157 = vmatprep.subr.mxu0 0.0
    %158 = vmatpush1.msra.mxu0 %v104
    %159 = vmatprep.subr.mxu0 0.0
    %160 = vmatpush1.msra.mxu0 %v105
    %161 = vmatprep.subr.mxu0 0.0
    %162 = vmatpush1.msra.mxu0 %v106
    %163 = vmatprep.subr.mxu0 0.0
    %164 = vmatpush1.msra.mxu0 %v107
    %165 = vmatprep.subr.mxu0 0.0
    %166 = vmatpush1.msra.mxu0 %v108
    %167 = vmatprep.subr.mxu0 0.0
    %168 = vmatpush1.msra.mxu0 %v109
    %169 = vmatprep.subr.mxu0 0.0
    %170 = vmatpush1.msra.mxu0 %v110
    %171 = vmatprep.subr.mxu0 0.0
    %172 = vmatpush1.msra.mxu0 %v111
    %173 = vmatprep.subr.mxu0 0.0
    %174 = vmatpush1.msra.mxu0 %v112
    %175 = vmatprep.subr.mxu0 0.0
    %176 = vmatpush1.msra.mxu0 %v113
    %177 = vmatprep.subr.mxu0 0.0
    %178 = vmatpush1.msra.mxu0 %v114
    %179 = vmatprep.subr.mxu0 0.0
    %180 = vmatpush1.msra.mxu0 %v115
    %181 = vmatprep.subr.mxu0 0.0
    %182 = vmatpush1.msra.mxu0 %v116
    %183 = vmatprep.subr.mxu0 0.0
    %184 = vmatpush1.msra.mxu0 %v117
    %185 = vmatprep.subr.mxu0 0.0
    %186 = vmatpush1.msra.mxu0 %v118
    %187 = vmatprep.subr.mxu0 0.0
    %188 = vmatpush1.msra.mxu0 %v119
    %189 = vmatprep.subr.mxu0 0.0
    %190 = vmatpush1.msra.mxu0 %v120
    %191 = vmatprep.subr.mxu0 0.0
    %192 = vmatpush1.msra.mxu0 %v121
    %193 = vmatprep.subr.mxu0 0.0
    %194 = vmatpush1.msra.mxu0 %v122
    %195 = vmatprep.subr.mxu0 0.0
    %196 = vmatpush1.msra.mxu0 %v123
    %197 = vmatprep.subr.mxu0 0.0
    %198 = vmatpush1.msra.mxu0 %v124
    %199 = vmatprep.subr.mxu0 0.0
    %200 = vmatpush1.msra.mxu0 %v125
    %201 = vmatprep.subr.mxu0 0.0
    %202 = vmatpush1.msra.mxu0 %v126
    %203 = vmatprep.subr.mxu0 0.0
    %204 = vmatpush1.msra.mxu0 %v127
    %205 = vmatprep.subr.mxu0 0.0
    %206 = vmatpush1.msra.mxu0 %v128
    %207 = vmatprep.subr.mxu0 0.0
    %208 = vmatpush1.msra.mxu0 %v129
    %209 = vmatprep.subr.mxu0 0.0
    %210 = vmatpush1.msra.mxu0 %v130
    %211 = vmatprep.subr.mxu0 0.0
    %212 = vmatpush1.msra.mxu0 %v131
    %213 = vmatprep.subr.mxu0 0.0
    %214 = vmatpush1.msra.mxu0 %v132
    %215 = vmatprep.mubr.f32.mxu0 %v148
    %216 = vmatmul.mubr.f32.gmra.mrb[0].mxu0 %v147
    %v217 = vpop.f32.mrb[0].mxu0
    %v218 = vadd.f32 %v138, %v217
    %v219 = vpop.f32.mrb[0].mxu0
    %220 = vdwg.mxu0
    %v221 = vmul.f32 %v218, %v218
    %v222 = vsel %vm53, %v221, 0.0
    %223 = vadd.xlane.f32.xlu0 %v222
    %v224 = vpop.xlane.xlu0 %223
    %v225 = vmax.f32 %v224, 1e-24
    %v226 = vrsqrt.pop %v225
    %v227 = vmul.f32 %v218, %v226
    %228 = vst [vmem:[#allocation7] sm:$0x3] %v227
    // Predicated region
    $region22: #{tpu_custom_call.1} parent=1 // pred_check
      _
    $region23: #{tpu_custom_call.1} parent=1 // pred_check_branch
      %230 = sbr.rel (0) target = $region25
    $region24: #{tpu_custom_call.1} parent=1 // pred_region
      %s232 = ssub.s32 32, 32
      %233 = vsyncadd [#allocation4], %s232
      %s235 = sshll.u32 [#allocation7], 4
      %s236 = int_to_ptr.vmem [resolvable:$true] %s235
      %238 = dma.vmem_to_hbm [thread:$0]  %s236, 32, %s3, [#allocation4]
    $region25: #{tpu_custom_call.1} parent=1 // pred_fallthru
      _
    // Predicated region
    $region26: #{tpu_custom_call.1} parent=1 // pred_check
      _
    $region27: #{tpu_custom_call.1} parent=1 // pred_check_branch
      %240 = sbr.rel (0) target = $region29
    $region28: #{tpu_custom_call.1} parent=1 // pred_region
      %241 = dma.done [#allocation4], 32
    $region29: #{tpu_custom_call.1} parent=1 // pred_fallthru
      _
    %242 = vsyncpa [#allocation3], 1
    %243 = vsyncpa [#allocation6], 1
    %244 = vsyncpa [#allocation4], 1

</llo_original>
